<compile_context>
chip_gen: v5e
topology: v5e:2x2
jax: 0.10.0
libtpu: 0.0.40
codegen_flags: <defaults>
</compile_context>

<pallas_src>
import functools

import jax
import jax.numpy as jnp
from jax.experimental import pallas as pl
from jax.experimental.pallas import tpu as pltpu


def _sa_kernel(x_ref, p_ref, o_ref, *, hw):
    """One grid cell = (batch tile) x (group-pair tile) x (one branch).

    x_ref : (TB, 2, TG, half, hw)  input block; axis 1 is s (pairs group g'
                                   with group g' + groups/2 of the same b).
    p_ref : (half, 4)              per-channel params of this branch:
                                   [gate_w, gate_b, gn_w, gn_b].
    o_ref : (TB, TG, half, 2*hw)   shuffled output: lanes [0,hw) <- s=0,
                                   lanes [hw,2hw) <- s=1.
    """
    branch = pl.program_id(2)

    x = x_ref[...].astype(jnp.float32)           # (TB, 2, TG, half, hw)
    p = p_ref[...].astype(jnp.float32)           # (half, 4)
    w_g = p[:, 0:1]                              # sigmoid-gate weight
    b_g = p[:, 1:2]                              # sigmoid-gate bias
    w_n = p[:, 2:3]                              # GroupNorm weight
    b_n = p[:, 3:4]                              # GroupNorm bias

    inv_hw = jnp.float32(1.0 / hw)
    mean = jnp.sum(x, axis=-1, keepdims=True) * inv_hw   # (TB,2,TG,half,1)

    def _store(y):
        y = y.astype(o_ref.dtype)                # (TB, 2, TG, half, hw)
        o_ref[:, :, :, 0:hw] = y[:, 0]           # s = 0 -> even out channels
        o_ref[:, :, :, hw:2 * hw] = y[:, 1]      # s = 1 -> odd out channels

    @pl.when(branch == 0)
    def _():
        # Channel attention: AdaptiveAvgPool2d(1) -> affine -> sigmoid gate.
        gate = jax.nn.sigmoid(w_g * mean + b_g)  # per-channel scalar gate
        _store(x * gate)

    @pl.when(branch == 1)
    def _():
        # Spatial attention: GroupNorm(num_groups == num_channels), i.e.
        # per-channel per-sample normalization over H*W, eps = 1e-5.
        d = x - mean
        var = jnp.sum(d * d, axis=-1, keepdims=True) * inv_hw
        xhat = d * jax.lax.rsqrt(var + 1e-5)
        gate = jax.nn.sigmoid(w_g * (w_n * xhat + b_n) + b_g)
        _store(x * gate)


def _pick_tiles(b, g2, half, hw, itemsize, budget_bytes=6 << 20):
    """Largest (batch_tile, group_tile) whose padded VMEM block fits budget."""
    def rup(v, m):
        return -(-v // m) * m

    def divs(n):
        return [d for d in range(1, n + 1) if n % d == 0]

    pad_rows = rup(half, 8)          # sublane padding of the VMEM tile
    lane_in = rup(hw, 128)
    lane_out = rup(2 * hw, 128)
    best, best_bytes = (1, 1), -1
    for tb in divs(b):
        for tg in divs(g2):
            cell = (2 * tb * tg * pad_rows * lane_in
                    + tb * tg * pad_rows * lane_out) * itemsize
            if cell <= budget_bytes and cell > best_bytes:
                best, best_bytes = (tb, tg), cell
    return best


def sa_layer_forward(x, cweight, cbias, sweight, sbias, gn_weight, gn_bias,
                     groups):
    """SA-Net sa_layer forward. x: (B, C, H, W); params: (C // (2*groups),)."""
    b, c, h, w = x.shape
    assert c % (2 * groups) == 0, "channel must be divisible by 2*groups"
    # TODO(synk): odd `groups` needs an unfused channel_shuffle fallback.
    assert groups % 2 == 0, "fused channel_shuffle path requires even groups"
    half = c // (2 * groups)
    g2 = groups // 2
    hw = h * w

    # Free (contiguous) reshape: (B, C, H, W) -> (b, s, g', branch, j, hw).
    xi = x.reshape(b, 2, g2, 2, half, hw)

    # Per-branch parameter table: (2, half, 4) = [gate_w, gate_b, gn_w, gn_b].
    params = jnp.stack(
        [jnp.stack([cweight, cbias,
                    jnp.ones_like(cweight), jnp.zeros_like(cweight)], axis=-1),
         jnp.stack([sweight, sbias, gn_weight, gn_bias], axis=-1)],
        axis=0).astype(jnp.float32)

    tb, tg = _pick_tiles(b, g2, half, hw, x.dtype.itemsize)

    out = pl.pallas_call(
        functools.partial(_sa_kernel, hw=hw),
        out_shape=jax.ShapeDtypeStruct((b, g2, 2, half, 2 * hw), x.dtype),
        grid=(b // tb, g2 // tg, 2),
        in_specs=[
            pl.BlockSpec((tb, 2, tg, None, half, hw),
                         lambda i, j, k: (i, 0, j, k, 0, 0)),
            pl.BlockSpec((None, half, 4), lambda i, j, k: (k, 0, 0)),
        ],
        out_specs=pl.BlockSpec((tb, tg, None, half, 2 * hw),
                               lambda i, j, k: (i, j, k, 0, 0)),
        compiler_params=pltpu.CompilerParams(
            dimension_semantics=("parallel", "parallel", "parallel"),
            vmem_limit_bytes=64 * 1024 * 1024),
    )(xi, params)

    # Free reshape back to NCHW -- the channel shuffle already happened in the
    # kernel's output layout.
    return out.reshape(b, c, h, w)


def sa_layer_ref(x, cweight, cbias, sweight, sbias, gnw, gnb, groups):
    """Pure-JAX reference mirroring the PyTorch forward exactly."""
    b, c, h, w = x.shape
    half = c // (2 * groups)
    xr = x.reshape(b * groups, c // groups, h, w)
    x0, x1 = xr[:, :half], xr[:, half:]

    mean0 = x0.mean(axis=(2, 3), keepdims=True)
    xn = x0 * jax.nn.sigmoid(cweight[None, :, None, None] * mean0
                             + cbias[None, :, None, None])

    mu = x1.mean(axis=(2, 3), keepdims=True)
    var = ((x1 - mu) ** 2).mean(axis=(2, 3), keepdims=True)
    xhat = (x1 - mu) / jnp.sqrt(var + 1e-5)
    xsn = xhat * gnw[None, :, None, None] + gnb[None, :, None, None]
    xs = x1 * jax.nn.sigmoid(sweight[None, :, None, None] * xsn
                             + sbias[None, :, None, None])

    out = jnp.concatenate([xn, xs], axis=1).reshape(b, c, h, w)
    out = out.reshape(b, 2, c // 2, h, w).transpose(0, 2, 1, 3, 4)
    return out.reshape(b, c, h, w)


if __name__ == "__main__":
    B, C, H, W = 2, 16, 16, 16
    GROUPS = 4
    HALF = C // (2 * GROUPS)

    key = jax.random.PRNGKey(0)
    kx, kcw, ksw, kgw, kgb = jax.random.split(key, 5)

    x = jax.random.normal(kx, (B, C, H, W), dtype=jnp.float32)

    # Small deterministic perturbations around the module defaults so the
    # gates are non-trivial.
    cweight = 0.1 * jax.random.normal(kcw, (HALF,), dtype=jnp.float32)
    cbias = jnp.ones((HALF,), jnp.float32)
    sweight = 0.1 * jax.random.normal(ksw, (HALF,), dtype=jnp.float32)
    sbias = jnp.ones((HALF,), jnp.float32)
    gn_weight = 1.0 + 0.1 * jax.random.normal(kgw, (HALF,), dtype=jnp.float32)
    gn_bias = 0.1 * jax.random.normal(kgb, (HALF,), dtype=jnp.float32)

    out = sa_layer_forward(x, cweight, cbias, sweight, sbias,
                           gn_weight, gn_bias, GROUPS)
    out = jax.block_until_ready(out)

    ref = sa_layer_ref(x, cweight, cbias, sweight, sbias,
                       gn_weight, gn_bias, GROUPS)
    ref = jax.block_until_ready(ref)

    assert out.shape == (B, C, H, W)
    max_err = float(jnp.max(jnp.abs(out - ref)))
    assert jnp.allclose(out, ref, rtol=1e-4, atol=1e-4), (
        f"max abs diff = {max_err}")

    print("KERNEL_OK")
</pallas_src>

<mosaic_0001>
module attributes {stable_mosaic.version = 11 : i64} {
  func.func @_sa_kernel(%arg0: i32, %arg1: i32, %arg2: i32, %arg3: memref<2x2x2x1x2x256xf32, #tpu.memory_space<vmem>>, %arg4: memref<1x2x4xf32, #tpu.memory_space<vmem>>, %arg5: memref<2x2x1x2x512xf32, #tpu.memory_space<vmem>>) attributes {dimension_semantics = [#tpu.dimension_semantics<parallel>, #tpu.dimension_semantics<parallel>, #tpu.dimension_semantics<parallel>], iteration_bounds = array<i64: 1, 1, 2>, scalar_prefetch = 0 : i64, scratch_operands = 0 : i64, tpu.core_type = #tpu.core_type<tc>, window_params = [{transform_indices = @transform_0, window_bounds = array<i64: 2, 2, 2, 1, 2, 256>}, {transform_indices = @transform_1, window_bounds = array<i64: 1, 2, 4>}, {transform_indices = @transform_2, window_bounds = array<i64: 2, 2, 1, 2, 512>}]} {
    %c0 = arith.constant 0 : index
    %c0_0 = arith.constant 0 : index
    %c0_1 = arith.constant 0 : index
    %c0_2 = arith.constant 0 : index
    %c0_3 = arith.constant 0 : index
    %c0_4 = arith.constant 0 : index
    %0 = vector.load %arg3[%c0, %c0_0, %c0_1, %c0_2, %c0_3, %c0_4] : memref<2x2x2x1x2x256xf32, #tpu.memory_space<vmem>>, vector<2x2x2x1x2x256xf32>
    %1 = vector.shape_cast %0 : vector<2x2x2x1x2x256xf32> to vector<2x2x2x2x256xf32>
    %c0_5 = arith.constant 0 : index
    %c0_6 = arith.constant 0 : index
    %c0_7 = arith.constant 0 : index
    %2 = vector.load %arg4[%c0_5, %c0_6, %c0_7] : memref<1x2x4xf32, #tpu.memory_space<vmem>>, vector<1x2x4xf32>
    %3 = vector.shape_cast %2 : vector<1x2x4xf32> to vector<2x4xf32>
    %4 = vector.extract_strided_slice %3 {offsets = [0, 0], sizes = [2, 1], strides = [1, 1]} : vector<2x4xf32> to vector<2x1xf32>
    %5 = vector.extract_strided_slice %3 {offsets = [0, 1], sizes = [2, 1], strides = [1, 1]} : vector<2x4xf32> to vector<2x1xf32>
    %6 = vector.extract_strided_slice %3 {offsets = [0, 2], sizes = [2, 1], strides = [1, 1]} : vector<2x4xf32> to vector<2x1xf32>
    %7 = vector.extract_strided_slice %3 {offsets = [0, 3], sizes = [2, 1], strides = [1, 1]} : vector<2x4xf32> to vector<2x1xf32>
    %cst = arith.constant dense<0.000000e+00> : vector<2x2x2x2xf32>
    %8 = vector.multi_reduction <add>, %1, %cst [4] : vector<2x2x2x2x256xf32> to vector<2x2x2x2xf32>
    %9 = vector.shape_cast %8 : vector<2x2x2x2xf32> to vector<2x2x2x2x1xf32>
    %cst_8 = arith.constant 3.906250e-03 : f32
    %10 = vector.broadcast %cst_8 : f32 to vector<2x2x2x2x1xf32>
    %11 = arith.mulf %9, %10 : vector<2x2x2x2x1xf32>
    %c0_i32 = arith.constant 0 : i32
    %12 = arith.cmpi eq, %arg2, %c0_i32 : i32
    %13 = arith.extui %12 : i1 to i32
    %c0_i32_9 = arith.constant 0 : i32
    %14 = arith.cmpi ne, %13, %c0_i32_9 : i32
    scf.if %14 {
      %18 = vector.shape_cast %4 : vector<2x1xf32> to vector<1x1x1x2x1xf32>
      %19 = vector.broadcast %18 : vector<1x1x1x2x1xf32> to vector<2x2x2x2x1xf32>
      %20 = arith.mulf %19, %11 : vector<2x2x2x2x1xf32>
      %21 = vector.shape_cast %5 : vector<2x1xf32> to vector<1x1x1x2x1xf32>
      %22 = vector.broadcast %21 : vector<1x1x1x2x1xf32> to vector<2x2x2x2x1xf32>
      %23 = arith.addf %20, %22 : vector<2x2x2x2x1xf32>
      %24 = arith.negf %23 : vector<2x2x2x2x1xf32>
      %25 = math.exp %24 : vector<2x2x2x2x1xf32>
      %cst_12 = arith.constant 1.000000e+00 : f32
      %26 = vector.broadcast %cst_12 : f32 to vector<2x2x2x2x1xf32>
      %27 = arith.addf %26, %25 : vector<2x2x2x2x1xf32>
      %28 = arith.divf %26, %27 : vector<2x2x2x2x1xf32>
      %29 = vector.broadcast %28 : vector<2x2x2x2x1xf32> to vector<2x2x2x2x256xf32>
      %30 = arith.mulf %1, %29 : vector<2x2x2x2x256xf32>
      %31 = vector.extract_strided_slice %30 {offsets = [0, 0, 0, 0, 0], sizes = [2, 1, 2, 2, 256], strides = [1, 1, 1, 1, 1]} : vector<2x2x2x2x256xf32> to vector<2x1x2x2x256xf32>
      %32 = vector.shape_cast %31 : vector<2x1x2x2x256xf32> to vector<2x2x2x256xf32>
      %c0_13 = arith.constant 0 : index
      %c0_14 = arith.constant 0 : index
      %c0_15 = arith.constant 0 : index
      %c0_16 = arith.constant 0 : index
      %c0_17 = arith.constant 0 : index
      %33 = vector.load %arg5[%c0_13, %c0_14, %c0_15, %c0_16, %c0_17] : memref<2x2x1x2x512xf32, #tpu.memory_space<vmem>>, vector<2x2x1x2x256xf32>
      %34 = vector.shape_cast %33 : vector<2x2x1x2x256xf32> to vector<2x2x2x256xf32>
      %35 = vector.shape_cast %32 : vector<2x2x2x256xf32> to vector<2x2x1x2x256xf32>
      tpu.vector_store %arg5[%c0_13, %c0_14, %c0_15, %c0_16, %c0_17], %35 {strides = array<i32>} : memref<2x2x1x2x512xf32, #tpu.memory_space<vmem>>, vector<2x2x1x2x256xf32>,
      %36 = vector.extract_strided_slice %30 {offsets = [0, 1, 0, 0, 0], sizes = [2, 1, 2, 2, 256], strides = [1, 1, 1, 1, 1]} : vector<2x2x2x2x256xf32> to vector<2x1x2x2x256xf32>
      %37 = vector.shape_cast %36 : vector<2x1x2x2x256xf32> to vector<2x2x2x256xf32>
      %c0_18 = arith.constant 0 : index
      %c0_19 = arith.constant 0 : index
      %c0_20 = arith.constant 0 : index
      %c0_21 = arith.constant 0 : index
      %c256 = arith.constant 256 : index
      %38 = vector.load %arg5[%c0_18, %c0_19, %c0_20, %c0_21, %c256] : memref<2x2x1x2x512xf32, #tpu.memory_space<vmem>>, vector<2x2x1x2x256xf32>
      %39 = vector.shape_cast %38 : vector<2x2x1x2x256xf32> to vector<2x2x2x256xf32>
      %40 = vector.shape_cast %37 : vector<2x2x2x256xf32> to vector<2x2x1x2x256xf32>
      tpu.vector_store %arg5[%c0_18, %c0_19, %c0_20, %c0_21, %c256], %40 {strides = array<i32>} : memref<2x2x1x2x512xf32, #tpu.memory_space<vmem>>, vector<2x2x1x2x256xf32>,
    } else {
    }
    %c1_i32 = arith.constant 1 : i32
    %15 = arith.cmpi eq, %arg2, %c1_i32 : i32
    %16 = arith.extui %15 : i1 to i32
    %cst_10 = arith.constant 3.906250e-03 : f32
    %c0_i32_11 = arith.constant 0 : i32
    %17 = arith.cmpi ne, %16, %c0_i32_11 : i32
    scf.if %17 {
      %18 = vector.broadcast %11 : vector<2x2x2x2x1xf32> to vector<2x2x2x2x256xf32>
      %19 = arith.subf %1, %18 : vector<2x2x2x2x256xf32>
      %20 = arith.mulf %19, %19 : vector<2x2x2x2x256xf32>
      %cst_12 = arith.constant dense<0.000000e+00> : vector<2x2x2x2xf32>
      %21 = vector.multi_reduction <add>, %20, %cst_12 [4] : vector<2x2x2x2x256xf32> to vector<2x2x2x2xf32>
      %22 = vector.shape_cast %21 : vector<2x2x2x2xf32> to vector<2x2x2x2x1xf32>
      %23 = vector.broadcast %cst_10 : f32 to vector<2x2x2x2x1xf32>
      %24 = arith.mulf %22, %23 : vector<2x2x2x2x1xf32>
      %cst_13 = arith.constant 9.99999974E-6 : f32
      %25 = vector.broadcast %cst_13 : f32 to vector<2x2x2x2x1xf32>
      %26 = arith.addf %24, %25 : vector<2x2x2x2x1xf32>
      %27 = math.rsqrt %26 : vector<2x2x2x2x1xf32>
      %28 = vector.broadcast %27 : vector<2x2x2x2x1xf32> to vector<2x2x2x2x256xf32>
      %29 = arith.mulf %19, %28 : vector<2x2x2x2x256xf32>
      %30 = vector.shape_cast %6 : vector<2x1xf32> to vector<1x1x1x2x1xf32>
      %31 = vector.broadcast %30 : vector<1x1x1x2x1xf32> to vector<2x2x2x2x256xf32>
      %32 = arith.mulf %31, %29 : vector<2x2x2x2x256xf32>
      %33 = vector.shape_cast %7 : vector<2x1xf32> to vector<1x1x1x2x1xf32>
      %34 = vector.broadcast %33 : vector<1x1x1x2x1xf32> to vector<2x2x2x2x256xf32>
      %35 = arith.addf %32, %34 : vector<2x2x2x2x256xf32>
      %36 = vector.shape_cast %4 : vector<2x1xf32> to vector<1x1x1x2x1xf32>
      %37 = vector.broadcast %36 : vector<1x1x1x2x1xf32> to vector<2x2x2x2x256xf32>
      %38 = arith.mulf %37, %35 : vector<2x2x2x2x256xf32>
      %39 = vector.shape_cast %5 : vector<2x1xf32> to vector<1x1x1x2x1xf32>
      %40 = vector.broadcast %39 : vector<1x1x1x2x1xf32> to vector<2x2x2x2x256xf32>
      %41 = arith.addf %38, %40 : vector<2x2x2x2x256xf32>
      %42 = arith.negf %41 : vector<2x2x2x2x256xf32>
      %43 = math.exp %42 : vector<2x2x2x2x256xf32>
      %cst_14 = arith.constant 1.000000e+00 : f32
      %44 = vector.broadcast %cst_14 : f32 to vector<2x2x2x2x256xf32>
      %45 = arith.addf %44, %43 : vector<2x2x2x2x256xf32>
      %46 = arith.divf %44, %45 : vector<2x2x2x2x256xf32>
      %47 = arith.mulf %1, %46 : vector<2x2x2x2x256xf32>
      %48 = vector.extract_strided_slice %47 {offsets = [0, 0, 0, 0, 0], sizes = [2, 1, 2, 2, 256], strides = [1, 1, 1, 1, 1]} : vector<2x2x2x2x256xf32> to vector<2x1x2x2x256xf32>
      %49 = vector.shape_cast %48 : vector<2x1x2x2x256xf32> to vector<2x2x2x256xf32>
      %c0_15 = arith.constant 0 : index
      %c0_16 = arith.constant 0 : index
      %c0_17 = arith.constant 0 : index
      %c0_18 = arith.constant 0 : index
      %c0_19 = arith.constant 0 : index
      %50 = vector.load %arg5[%c0_15, %c0_16, %c0_17, %c0_18, %c0_19] : memref<2x2x1x2x512xf32, #tpu.memory_space<vmem>>, vector<2x2x1x2x256xf32>
      %51 = vector.shape_cast %50 : vector<2x2x1x2x256xf32> to vector<2x2x2x256xf32>
      %52 = vector.shape_cast %49 : vector<2x2x2x256xf32> to vector<2x2x1x2x256xf32>
      tpu.vector_store %arg5[%c0_15, %c0_16, %c0_17, %c0_18, %c0_19], %52 {strides = array<i32>} : memref<2x2x1x2x512xf32, #tpu.memory_space<vmem>>, vector<2x2x1x2x256xf32>,
      %53 = vector.extract_strided_slice %47 {offsets = [0, 1, 0, 0, 0], sizes = [2, 1, 2, 2, 256], strides = [1, 1, 1, 1, 1]} : vector<2x2x2x2x256xf32> to vector<2x1x2x2x256xf32>
      %54 = vector.shape_cast %53 : vector<2x1x2x2x256xf32> to vector<2x2x2x256xf32>
      %c0_20 = arith.constant 0 : index
      %c0_21 = arith.constant 0 : index
      %c0_22 = arith.constant 0 : index
      %c0_23 = arith.constant 0 : index
      %c256 = arith.constant 256 : index
      %55 = vector.load %arg5[%c0_20, %c0_21, %c0_22, %c0_23, %c256] : memref<2x2x1x2x512xf32, #tpu.memory_space<vmem>>, vector<2x2x1x2x256xf32>
      %56 = vector.shape_cast %55 : vector<2x2x1x2x256xf32> to vector<2x2x2x256xf32>
      %57 = vector.shape_cast %54 : vector<2x2x2x256xf32> to vector<2x2x1x2x256xf32>
      tpu.vector_store %arg5[%c0_20, %c0_21, %c0_22, %c0_23, %c256], %57 {strides = array<i32>} : memref<2x2x1x2x512xf32, #tpu.memory_space<vmem>>, vector<2x2x1x2x256xf32>,
    } else {
    }
    return
  }
  func.func @transform_0(%arg0: i32, %arg1: i32, %arg2: i32) -> (i32, i32, i32, i32, i32, i32) {
    %c0_i32 = arith.constant 0 : i32
    %c0_i32_0 = arith.constant 0 : i32
    %c0_i32_1 = arith.constant 0 : i32
    %c0_i32_2 = arith.constant 0 : i32
    return %arg0, %c0_i32, %arg1, %arg2, %c0_i32_0, %c0_i32_1 : i32, i32, i32, i32, i32, i32
  }
  func.func @transform_1(%arg0: i32, %arg1: i32, %arg2: i32) -> (i32, i32, i32) {
    %c0_i32 = arith.constant 0 : i32
    %c0_i32_0 = arith.constant 0 : i32
    %c0_i32_1 = arith.constant 0 : i32
    return %arg2, %c0_i32, %c0_i32_0 : i32, i32, i32
  }
  func.func @transform_2(%arg0: i32, %arg1: i32, %arg2: i32) -> (i32, i32, i32, i32, i32) {
    %c0_i32 = arith.constant 0 : i32
    %c0_i32_0 = arith.constant 0 : i32
    %c0_i32_1 = arith.constant 0 : i32
    return %arg0, %arg1, %arg2, %c0_i32, %c0_i32_0 : i32, i32, i32, i32, i32
  }
}

</mosaic_0001>

<llo_original>
// kernel: tpu_custom_call.1
$region0: #{tpu_custom_call.1}
  #allocation0 [shape = 'u32[]', space=smem, size = 0x4, offset = 0x4, fixed_abs, tag = 'smem constant byte address 0x4 - core index']
  #allocation1 [shape = 'u32[72,128]{1,0:T(1,128)}', space=vmem, size = 0x9000, scoped, tag = 'internal scratch']
  %s0 = inlined_call_operand.hbm [shape: f32[2,2,2,2,2,256], index: 0, kind: input, shape index: {}]
  %s1 = inlined_call_operand.hbm [shape: f32[2,2,4], index: 1, kind: input, shape index: {}]
  %s2 = inlined_call_operand.hbm [shape: f32[2,2,2,2,512], index: 2, kind: output, shape index: {}]
  %s3 = sld [smem:[#allocation0]]
  $region57: #{tpu_custom_call.1} parent=0
    _
  %s5 = ssub.s32 1, %s3
  %s6 = scalar_select 0, %s5, %s3
  $region1: #{tpu_custom_call.1} parent=0
    #allocation2 [shape = 'u8[32768]{0}', space=vmem, size = 0x8000, scoped, tag = 'input window, operand 0']
    #allocation3 [shape = 's32[2]{0}', space=sflag, size = 0x8, scoped, tag = 'scoped memory for tpu_custom_call.1']
    #allocation4 [shape = 's32[2]{0}', space=sflag, size = 0x8, scoped, tag = 'scoped memory for tpu_custom_call.1']
    #allocation5 [shape = 'u8[2048]{0}', space=vmem, size = 0x800, scoped, tag = 'input window, operand 1']
    #allocation6 [shape = 's32[2]{0}', space=sflag, size = 0x8, scoped, tag = 'scoped memory for tpu_custom_call.1']
    #allocation7 [shape = 'u8[32768]{0}', space=vmem, size = 0x8000, scoped, tag = 'output window, operand 0']
    %7 = vsyncpa [#allocation3], 0
    %s8 = scalar_lea.sflag [#allocation3], 1
    %9 = vsyncpa %s8, 0
    %10 = vsyncpa [#allocation6], 0
    %s11 = scalar_lea.sflag [#allocation6], 1
    %12 = vsyncpa %s11, 0
    %13 = vsyncpa [#allocation4], 0
    %s14 = scalar_lea.sflag [#allocation4], 1
    %15 = vsyncpa %s14, 0
    loop: start=0, step=1, limit=4
    $region2: #{tpu_custom_call.1} parent=1 // loop_pre_header
      _
    $region3: #{tpu_custom_call.1} parent=1 // loop_header
      %s17 = sphi 0, %s21
      %p18 = scmp.ge.s32.totalorder %s17, 4
      %s24 = sphi 0, %s43
      %s25 = sphi 0, %s39
      %s26 = sphi 0, %s35
      %s27 = sphi 0, %s24
      %s28 = sphi 0, %s25
      %s29 = sphi 0, %s26
      %s30 = sphi 0, %s27
      %s31 = sphi 0, %s28
      %s32 = sphi 0, %s29
      %s50 = sphi 0, %s52
      %s53 = sphi 0, %s50
      %s54 = sphi 0, %s53
      %s70 = sphi 0, %s54
      %s76 = sphi 0, %s78
      %s79 = sphi 0, %s76
      %s80 = sphi 0, %s79
      %s96 = sphi 0, %s80
      %s106 = sphi 0, %s108
      %s109 = sphi 0, %s106
      %s110 = sphi 0, %s109
      %s126 = sphi 0, %s110
    $region4: #{tpu_custom_call.1} parent=1 // loop_header_branch
      %20 = sbr.rel (%p18) target = $region8
    $region5: #{tpu_custom_call.1} parent=1 // loop_body
      %s22 = ssub.s32 %s17, 1
      %s23 = ssub.s32 %s17, 2
      %s33 = sadd.s32 1, %s26
      %p34 = scmp.ge.s32.totalorder %s33, 2
      %s35 = scalar_select %p34, 0, %s33
      %s36 = sadd.s32 1, %s25
      %s37 = scalar_select %p34, %s36, %s25
      %p38 = scmp.ge.s32.totalorder %s37, 1
      %s39 = scalar_select %p38, 0, %s37
      %s40 = sadd.s32 1, %s24
      %s41 = scalar_select %p38, %s40, %s24
      %p42 = scmp.ge.s32.totalorder %s41, 1
      %s43 = scalar_select %p42, 0, %s41
      %s44 = ssub.s32 %s24, %s43
      %s45 = ssub.s32 %s25, %s39
      %s46 = sor.u32 %s44, %s45
      %s47 = ssub.s32 %s26, %s35
      %s48 = sor.u32 %s46, %s47
      %p49 = scmp.eq.s32.totalorder %s48, 0
      %s51 = sadd.s32 %s50, 1
      %s52 = scalar_select %p49, %s50, %s51
      %p55 = pneg %p49
      %p56 = scmp.eq.s32.totalorder %s17, 1
      %p57 = por %p55, %p56
      %p58 = scmp.ne.s32.totalorder %s50, %s53
      %p59 = scmp.eq.s32.totalorder %s17, 0
      %p60 = por %p58, %p59
      %p61 = scmp.ne.s32.totalorder %s50, %s53
      %p62 = scmp.eq.s32.totalorder %s22, 1
      %p63 = por %p61, %p62
      %p64 = scmp.ne.s32.totalorder %s53, %s54
      %p65 = scmp.eq.s32.totalorder %s22, 0
      %p66 = por %p64, %p65
      %p67 = scmp.ne.s32.totalorder %s53, %s54
      %p68 = scmp.eq.s32.totalorder %s23, 1
      %p69 = por %p67, %p68
      %p71 = scmp.ne.s32.totalorder %s54, %s70
      %p72 = scmp.eq.s32.totalorder %s23, 0
      %p73 = por %p71, %p72
      %s74 = ssub.s32 %s26, %s35
      %p75 = scmp.eq.s32.totalorder %s74, 0
      %s77 = sadd.s32 %s76, 1
      %s78 = scalar_select %p75, %s76, %s77
      %p81 = pneg %p75
      %p82 = scmp.eq.s32.totalorder %s17, 1
      %p83 = por %p81, %p82
      %p84 = scmp.ne.s32.totalorder %s76, %s79
      %p85 = scmp.eq.s32.totalorder %s17, 0
      %p86 = por %p84, %p85
      %p87 = scmp.ne.s32.totalorder %s76, %s79
      %p88 = scmp.eq.s32.totalorder %s22, 1
      %p89 = por %p87, %p88
      %p90 = scmp.ne.s32.totalorder %s79, %s80
      %p91 = scmp.eq.s32.totalorder %s22, 0
      %p92 = por %p90, %p91
      %p93 = scmp.ne.s32.totalorder %s79, %s80
      %p94 = scmp.eq.s32.totalorder %s23, 1
      %p95 = por %p93, %p94
      %p97 = scmp.ne.s32.totalorder %s80, %s96
      %p98 = scmp.eq.s32.totalorder %s23, 0
      %p99 = por %p97, %p98
      %s100 = ssub.s32 %s24, %s43
      %s101 = ssub.s32 %s25, %s39
      %s102 = sor.u32 %s100, %s101
      %s103 = ssub.s32 %s26, %s35
      %s104 = sor.u32 %s102, %s103
      %p105 = scmp.eq.s32.totalorder %s104, 0
      %s107 = sadd.s32 %s106, 1
      %s108 = scalar_select %p105, %s106, %s107
      %p111 = pneg %p105
      %p112 = scmp.eq.s32.totalorder %s17, 1
      %p113 = por %p111, %p112
      %p114 = scmp.ne.s32.totalorder %s106, %s109
      %p115 = scmp.eq.s32.totalorder %s17, 0
      %p116 = por %p114, %p115
      %p117 = scmp.ne.s32.totalorder %s106, %s109
      %p118 = scmp.eq.s32.totalorder %s22, 1
      %p119 = por %p117, %p118
      %p120 = scmp.ne.s32.totalorder %s109, %s110
      %p121 = scmp.eq.s32.totalorder %s22, 0
      %p122 = por %p120, %p121
      %p123 = scmp.ne.s32.totalorder %s109, %s110
      %p124 = scmp.eq.s32.totalorder %s23, 1
      %p125 = por %p123, %p124
      %p127 = scmp.ne.s32.totalorder %s110, %s126
      %p128 = scmp.eq.s32.totalorder %s23, 0
      %p129 = por %p127, %p128
      %p130 = scmp.le.s32.totalorder 1, %s17
      %p131 = scmp.lt.s32.totalorder %s17, 3
      %p132 = pnand %p130, %p131
      %p133 = pneg %p132
      // Predicated region
      $region9: #{tpu_custom_call.1} parent=5 // pred_check
        _
      $region10: #{tpu_custom_call.1} parent=5 // pred_check_branch
        %135 = sbr.rel (%p132) target = $region12
      $region11: #{tpu_custom_call.1} parent=5 // pred_region
        %s136 = ssub.s32 %s17, 1
      $region12: #{tpu_custom_call.1} parent=5 // pred_fallthru
        _
      %p137 = scmp.lt.s32.totalorder %s17, 2
      // Predicated region
      $region13: #{tpu_custom_call.1} parent=5 // pred_check
        %p138 = pneg %p137
      $region14: #{tpu_custom_call.1} parent=5 // pred_check_branch
        %140 = sbr.rel (%p138) target = $region16
      $region15: #{tpu_custom_call.1} parent=5 // pred_region
        // Predicated region
        $region17: #{tpu_custom_call.1} parent=15 // pred_check
          %p141 = pneg %p60
        $region18: #{tpu_custom_call.1} parent=15 // pred_check_branch
          %143 = sbr.rel (%p141) target = $region20
        $region19: #{tpu_custom_call.1} parent=15 // pred_region
          %s144 = sand.u32 %s50, 1
          %s145 = scalar_lea.sflag [#allocation3], %s144
          %s146 = sand.u32 %s50, 1
          %s147 = smul.addr %s146, 32
          %s148 = scalar_lea.vmem [#allocation2], %s147
          %s149 = smul.u32 2, %s24
          %s150 = smul.u32 2, %s25
          %152 = vsyncadd %s145, 0
          %s153 = smul.addr %s26, 2
          %s154 = smul.addr %s150, 4
          %s155 = sadd.s32 %s153, %s154
          %s156 = smul.addr %s149, 16
          %s157 = sadd.s32 %s155, %s156
          %s158 = smul.addr %s157, 2
          %s159 = scalar_lea.hbm %s0, %s158
          %s160 = sshll.u32 %s159, 4
          %s161 = int_to_ptr.hbm [resolvable:$true] %s160
          %s162 = sshll.u32 %s148, 4
          %s163 = int_to_ptr.vmem [resolvable:$true] %s162
          %168 = dma.hbm_to_vmem [thread:$0]  %s161, 512, %s163, %s145, 128, 64, 4
        $region20: #{tpu_custom_call.1} parent=15 // pred_fallthru
          _
        // Predicated region
        $region21: #{tpu_custom_call.1} parent=15 // pred_check
          %p169 = pneg %p86
        $region22: #{tpu_custom_call.1} parent=15 // pred_check_branch
          %171 = sbr.rel (%p169) target = $region24
        $region23: #{tpu_custom_call.1} parent=15 // pred_region
          %s172 = sand.u32 %s76, 1
          %s173 = scalar_lea.sflag [#allocation6], %s172
          %s174 = sand.u32 %s76, 1
          %s175 = smul.addr %s174, 2
          %s176 = scalar_lea.vmem [#allocation5], %s175
          %178 = vsyncadd %s173, 0
          %s179 = smul.addr %s26, 2
          %s180 = scalar_lea.hbm %s1, %s179
          %s182 = sshll.u32 %s180, 4
          %s183 = int_to_ptr.hbm [resolvable:$true] %s182
          %s184 = sshll.u32 %s176, 4
          %s185 = int_to_ptr.vmem [resolvable:$true] %s184
          %187 = dma.hbm_to_vmem [thread:$0]  %s183, 32, %s185, %s173
        $region24: #{tpu_custom_call.1} parent=15 // pred_fallthru
          _
      $region16: #{tpu_custom_call.1} parent=5 // pred_fallthru
        _
      %p188 = scmp.le.s32.totalorder 1, %s17
      %p189 = scmp.lt.s32.totalorder %s17, 3
      %p190 = pnand %p188, %p189
      %p191 = pneg %p190
      // Predicated region
      $region25: #{tpu_custom_call.1} parent=5 // pred_check
        _
      $region26: #{tpu_custom_call.1} parent=5 // pred_check_branch
        %193 = sbr.rel (%p190) target = $region28
      $region27: #{tpu_custom_call.1} parent=5 // pred_region
        %s194 = ssub.s32 %s17, 1
        %s195 = sand.u32 %s53, 1
        %s196 = scalar_lea.sflag [#allocation3], %s195
        %s197 = sand.u32 %s53, 1
        %s198 = smul.addr %s197, 32
        %s199 = scalar_lea.vmem [#allocation2], %s198
        // Predicated region
        $region29: #{tpu_custom_call.1} parent=27 // pred_check
          %p200 = pneg %p66
        $region30: #{tpu_custom_call.1} parent=27 // pred_check_branch
          %202 = sbr.rel (%p200) target = $region32
        $region31: #{tpu_custom_call.1} parent=27 // pred_region
          %204 = dma.done %s196, 512
        $region32: #{tpu_custom_call.1} parent=27 // pred_fallthru
          _
        %s205 = sand.u32 %s79, 1
        %s206 = scalar_lea.sflag [#allocation6], %s205
        %s207 = sand.u32 %s79, 1
        %s208 = smul.addr %s207, 2
        %s209 = scalar_lea.vmem [#allocation5], %s208
        // Predicated region
        $region33: #{tpu_custom_call.1} parent=27 // pred_check
          %p210 = pneg %p92
        $region34: #{tpu_custom_call.1} parent=27 // pred_check_branch
          %212 = sbr.rel (%p210) target = $region36
        $region35: #{tpu_custom_call.1} parent=27 // pred_region
          %214 = dma.done %s206, 32
        $region36: #{tpu_custom_call.1} parent=27 // pred_fallthru
          _
        %s215 = sand.u32 %s53, 1
        %s216 = scalar_lea.sflag [#allocation3], %s215
        %s217 = sand.u32 %s53, 1
        %s218 = smul.addr %s217, 32
        %s219 = scalar_lea.vmem [#allocation2], %s218
        %p220 = pneg %p66
        %p221 = pneg %p63
        %s222 = sand.u32 %s79, 1
        %s223 = scalar_lea.sflag [#allocation6], %s222
        %s224 = sand.u32 %s79, 1
        %s225 = smul.addr %s224, 2
        %s226 = scalar_lea.vmem [#allocation5], %s225
        %p227 = pneg %p92
        %p228 = pneg %p89
        %p229 = pneg %p122
        %p230 = pneg %p119
        %s231 = sand.u32 %s109, 1
        %s232 = scalar_lea.sflag [#allocation4], %s231
        %s233 = sand.u32 %s109, 1
        %s234 = smul.addr %s233, 32
        %s235 = scalar_lea.vmem [#allocation7], %s234
        %s236 = smul.u32 2, %s27
        %s237 = smul.u32 2, %s28
        %s238 = smul.u32 2, %s27
        %s239 = smul.u32 2, %s28
        %v240 = vld [vmem:[%s199] sm:$0xf]
        %v241 = vld [vmem:[%s199 + $0x4] sm:$0xf]
        %v242 = vld [vmem:[%s199 + $0x8] sm:$0xf]
        %v243 = vld [vmem:[%s199 + $0xc] sm:$0xf]
        %v244 = vld [vmem:[%s199 + $0x10] sm:$0xf]
        %v245 = vld [vmem:[%s199 + $0x14] sm:$0xf]
        %v246 = vld [vmem:[%s199 + $0x18] sm:$0xf]
        %v247 = vld [vmem:[%s199 + $0x1c] sm:$0xf]
        %v248 = vld [vmem:[%s209] sm:$0x3]
        %257 = vst [vmem:[#allocation1] ss:$4 sm:$0xff] %v240
        %v258 = vld.sshfl [vmem:[#allocation1] sm:$0xff pattern:$0x73625140]
        %v259 = vld.sshfl [vmem:[#allocation1 + $0x8] sm:$0xff pattern:$0x73625140]
        %s260 = scalar_lea.vmem [#allocation1], 32
        %261 = vst [vmem:[%s260] ss:$4 sm:$0xff] %v241
        %v262 = vld.sshfl [vmem:[#allocation1 + $0x20] sm:$0xff pattern:$0x73625140]
        %v263 = vld.sshfl [vmem:[#allocation1 + $0x28] sm:$0xff pattern:$0x73625140]
        %264 = vst [vmem:[#allocation1] ss:$4 sm:$0xff] %v242
        %v265 = vld.sshfl [vmem:[#allocation1] sm:$0xff pattern:$0x73625140]
        %v266 = vld.sshfl [vmem:[#allocation1 + $0x8] sm:$0xff pattern:$0x73625140]
        %267 = vst [vmem:[%s260] ss:$4 sm:$0xff] %v243
        %v268 = vld.sshfl [vmem:[#allocation1 + $0x20] sm:$0xff pattern:$0x73625140]
        %v269 = vld.sshfl [vmem:[#allocation1 + $0x28] sm:$0xff pattern:$0x73625140]
        %270 = vst [vmem:[#allocation1] ss:$4 sm:$0xff] %v244
        %v271 = vld.sshfl [vmem:[#allocation1] sm:$0xff pattern:$0x73625140]
        %v272 = vld.sshfl [vmem:[#allocation1 + $0x8] sm:$0xff pattern:$0x73625140]
        %273 = vst [vmem:[%s260] ss:$4 sm:$0xff] %v245
        %v274 = vld.sshfl [vmem:[#allocation1 + $0x20] sm:$0xff pattern:$0x73625140]
        %v275 = vld.sshfl [vmem:[#allocation1 + $0x28] sm:$0xff pattern:$0x73625140]
        %276 = vst [vmem:[#allocation1] ss:$4 sm:$0xff] %v246
        %v277 = vld.sshfl [vmem:[#allocation1] sm:$0xff pattern:$0x73625140]
        %v278 = vld.sshfl [vmem:[#allocation1 + $0x8] sm:$0xff pattern:$0x73625140]
        %279 = vst [vmem:[%s260] ss:$4 sm:$0xff] %v247
        %v280 = vld.sshfl [vmem:[#allocation1 + $0x20] sm:$0xff pattern:$0x73625140]
        %v281 = vld.sshfl [vmem:[#allocation1 + $0x28] sm:$0xff pattern:$0x73625140]
        %vm298 = vcmask 1041408
        %v299 = vsel %vm298, %v258, 0.0
        %v300 = vsel %vm298, %v259, 0.0
        %v301 = vadd.f32 %v299, %v300
        %302 = vadd.xlane.f32.xlu0 %v301
        %v303 = vpop.xlane.xlu0 %302
        %v304 = vsel %vm298, %v262, 0.0
        %v305 = vsel %vm298, %v263, 0.0
        %v306 = vadd.f32 %v304, %v305
        %307 = vadd.xlane.f32.xlu0 %v306
        %v308 = vpop.xlane.xlu0 %307
        %v309 = vsel %vm298, %v265, 0.0
        %v310 = vsel %vm298, %v266, 0.0
        %v311 = vadd.f32 %v309, %v310
        %312 = vadd.xlane.f32.xlu0 %v311
        %v313 = vpop.xlane.xlu0 %312
        %v314 = vsel %vm298, %v268, 0.0
        %v315 = vsel %vm298, %v269, 0.0
        %v316 = vadd.f32 %v314, %v315
        %317 = vadd.xlane.f32.xlu0 %v316
        %v318 = vpop.xlane.xlu0 %317
        %v319 = vsel %vm298, %v271, 0.0
        %v320 = vsel %vm298, %v272, 0.0
        %v321 = vadd.f32 %v319, %v320
        %322 = vadd.xlane.f32.xlu0 %v321
        %v323 = vpop.xlane.xlu0 %322
        %v324 = vsel %vm298, %v274, 0.0
        %v325 = vsel %vm298, %v275, 0.0
        %v326 = vadd.f32 %v324, %v325
        %327 = vadd.xlane.f32.xlu0 %v326
        %v328 = vpop.xlane.xlu0 %327
        %v329 = vsel %vm298, %v277, 0.0
        %v330 = vsel %vm298, %v278, 0.0
        %v331 = vadd.f32 %v329, %v330
        %332 = vadd.xlane.f32.xlu0 %v331
        %v333 = vpop.xlane.xlu0 %332
        %v334 = vsel %vm298, %v280, 0.0
        %v335 = vsel %vm298, %v281, 0.0
        %v336 = vadd.f32 %v334, %v335
        %337 = vadd.xlane.f32.xlu0 %v336
        %v338 = vpop.xlane.xlu0 %337
        %v339 = vmul.f32 %v303, 0.00390625
        %v340 = vmul.f32 %v308, 0.00390625
        %v341 = vmul.f32 %v313, 0.00390625
        %v342 = vmul.f32 %v318, 0.00390625
        %v343 = vmul.f32 %v323, 0.00390625
        %v344 = vmul.f32 %v328, 0.00390625
        %v345 = vmul.f32 %v333, 0.00390625
        %v346 = vmul.f32 %v338, 0.00390625
        %p347 = scmp.eq.s32.totalorder %s29, 0
        // Predicated region
        $region37: #{tpu_custom_call.1} parent=27 // pred_check
          %p348 = pneg %p347
        $region38: #{tpu_custom_call.1} parent=27 // pred_check_branch
          %350 = sbr.rel (%p348) target = $region40
        $region39: #{tpu_custom_call.1} parent=27 // pred_region
          %v351 = vmul.f32 %v248, %v339
          %v352 = vmul.f32 %v248, %v340
          %v353 = vmul.f32 %v248, %v341
          %v354 = vmul.f32 %v248, %v342
          %v355 = vmul.f32 %v248, %v343
          %v356 = vmul.f32 %v248, %v344
          %v357 = vmul.f32 %v248, %v345
          %v358 = vmul.f32 %v248, %v346
          %360 = vrot.lane.b32.xlu0 %v248, 127
          %v361 = vpop.permute.xlu0 %360
          %v363 = vadd.f32 %v351, %v361
          %v364 = vadd.f32 %v352, %v361
          %v365 = vadd.f32 %v353, %v361
          %v366 = vadd.f32 %v354, %v361
          %v367 = vadd.f32 %v355, %v361
          %v368 = vadd.f32 %v356, %v361
          %v369 = vadd.f32 %v357, %v361
          %v370 = vadd.f32 %v358, %v361
          %v371 = vxor.u32 %v363, 2147483648
          %v372 = vxor.u32 %v364, 2147483648
          %v373 = vxor.u32 %v365, 2147483648
          %v374 = vxor.u32 %v366, 2147483648
          %v375 = vxor.u32 %v367, 2147483648
          %v376 = vxor.u32 %v368, 2147483648
          %v377 = vxor.u32 %v369, 2147483648
          %v378 = vxor.u32 %v370, 2147483648
          %v379 = vmul.f32 %v371, 1.442695
          %v380 = vpow.pop %v379
          %v381 = vmul.f32 %v372, 1.442695
          %v382 = vpow.pop %v381
          %v383 = vmul.f32 %v373, 1.442695
          %v384 = vpow.pop %v383
          %v385 = vmul.f32 %v374, 1.442695
          %v386 = vpow.pop %v385
          %v387 = vmul.f32 %v375, 1.442695
          %v388 = vpow.pop %v387
          %v389 = vmul.f32 %v376, 1.442695
          %v390 = vpow.pop %v389
          %v391 = vmul.f32 %v377, 1.442695
          %v392 = vpow.pop %v391
          %v393 = vmul.f32 %v378, 1.442695
          %v394 = vpow.pop %v393
          %v395 = vadd.f32 %v380, 1.0
          %v396 = vadd.f32 %v382, 1.0
          %v397 = vadd.f32 %v384, 1.0
          %v398 = vadd.f32 %v386, 1.0
          %v399 = vadd.f32 %v388, 1.0
          %v400 = vadd.f32 %v390, 1.0
          %v401 = vadd.f32 %v392, 1.0
          %v402 = vadd.f32 %v394, 1.0
          %v403 = vrcp.pop %v395
          %v404 = vmul.f32 %v395, %v403
          %v405 = vsub.f32 1.0, %v404
          %v406 = vmul.f32 %v403, %v405
          %v407 = vadd.f32 %v403, %v406
          %vm408 = vweird.f32 %v395
          %vm409 = vweird.f32 %v403
          %vm410 = vmor %vm408, %vm409
          %v411 = vsel %vm410, %v403, %v407
          %v412 = vand.u32 2147483647, %v395
          %vm413 = vcmp.eq.f32.partialorder %v412, 8.507059e+37
          %v414 = vand.u32 %v395, 2147483648
          %v415 = vor.u32 1.1754944e-38, %v414
          %v416 = vsel %vm413, %v415, %v411
          %v417 = vmul.f32 1.0, %v416
          %v418 = vrcp.pop %v396
          %v419 = vmul.f32 %v396, %v418
          %v420 = vsub.f32 1.0, %v419
          %v421 = vmul.f32 %v418, %v420
          %v422 = vadd.f32 %v418, %v421
          %vm423 = vweird.f32 %v396
          %vm424 = vweird.f32 %v418
          %vm425 = vmor %vm423, %vm424
          %v426 = vsel %vm425, %v418, %v422
          %v427 = vand.u32 2147483647, %v396
          %vm428 = vcmp.eq.f32.partialorder %v427, 8.507059e+37
          %v429 = vand.u32 %v396, 2147483648
          %v430 = vor.u32 1.1754944e-38, %v429
          %v431 = vsel %vm428, %v430, %v426
          %v432 = vmul.f32 1.0, %v431
          %v433 = vrcp.pop %v397
          %v434 = vmul.f32 %v397, %v433
          %v435 = vsub.f32 1.0, %v434
          %v436 = vmul.f32 %v433, %v435
          %v437 = vadd.f32 %v433, %v436
          %vm438 = vweird.f32 %v397
          %vm439 = vweird.f32 %v433
          %vm440 = vmor %vm438, %vm439
          %v441 = vsel %vm440, %v433, %v437
          %v442 = vand.u32 2147483647, %v397
          %vm443 = vcmp.eq.f32.partialorder %v442, 8.507059e+37
          %v444 = vand.u32 %v397, 2147483648
          %v445 = vor.u32 1.1754944e-38, %v444
          %v446 = vsel %vm443, %v445, %v441
          %v447 = vmul.f32 1.0, %v446
          %v448 = vrcp.pop %v398
          %v449 = vmul.f32 %v398, %v448
          %v450 = vsub.f32 1.0, %v449
          %v451 = vmul.f32 %v448, %v450
          %v452 = vadd.f32 %v448, %v451
          %vm453 = vweird.f32 %v398
          %vm454 = vweird.f32 %v448
          %vm455 = vmor %vm453, %vm454
          %v456 = vsel %vm455, %v448, %v452
          %v457 = vand.u32 2147483647, %v398
          %vm458 = vcmp.eq.f32.partialorder %v457, 8.507059e+37
          %v459 = vand.u32 %v398, 2147483648
          %v460 = vor.u32 1.1754944e-38, %v459
          %v461 = vsel %vm458, %v460, %v456
          %v462 = vmul.f32 1.0, %v461
          %v463 = vrcp.pop %v399
          %v464 = vmul.f32 %v399, %v463
          %v465 = vsub.f32 1.0, %v464
          %v466 = vmul.f32 %v463, %v465
          %v467 = vadd.f32 %v463, %v466
          %vm468 = vweird.f32 %v399
          %vm469 = vweird.f32 %v463
          %vm470 = vmor %vm468, %vm469
          %v471 = vsel %vm470, %v463, %v467
          %v472 = vand.u32 2147483647, %v399
          %vm473 = vcmp.eq.f32.partialorder %v472, 8.507059e+37
          %v474 = vand.u32 %v399, 2147483648
          %v475 = vor.u32 1.1754944e-38, %v474
          %v476 = vsel %vm473, %v475, %v471
          %v477 = vmul.f32 1.0, %v476
          %v478 = vrcp.pop %v400
          %v479 = vmul.f32 %v400, %v478
          %v480 = vsub.f32 1.0, %v479
          %v481 = vmul.f32 %v478, %v480
          %v482 = vadd.f32 %v478, %v481
          %vm483 = vweird.f32 %v400
          %vm484 = vweird.f32 %v478
          %vm485 = vmor %vm483, %vm484
          %v486 = vsel %vm485, %v478, %v482
          %v487 = vand.u32 2147483647, %v400
          %vm488 = vcmp.eq.f32.partialorder %v487, 8.507059e+37
          %v489 = vand.u32 %v400, 2147483648
          %v490 = vor.u32 1.1754944e-38, %v489
          %v491 = vsel %vm488, %v490, %v486
          %v492 = vmul.f32 1.0, %v491
          %v493 = vrcp.pop %v401
          %v494 = vmul.f32 %v401, %v493
          %v495 = vsub.f32 1.0, %v494
          %v496 = vmul.f32 %v493, %v495
          %v497 = vadd.f32 %v493, %v496
          %vm498 = vweird.f32 %v401
          %vm499 = vweird.f32 %v493
          %vm500 = vmor %vm498, %vm499
          %v501 = vsel %vm500, %v493, %v497
          %v502 = vand.u32 2147483647, %v401
          %vm503 = vcmp.eq.f32.partialorder %v502, 8.507059e+37
          %v504 = vand.u32 %v401, 2147483648
          %v505 = vor.u32 1.1754944e-38, %v504
          %v506 = vsel %vm503, %v505, %v501
          %v507 = vmul.f32 1.0, %v506
          %v508 = vrcp.pop %v402
          %v509 = vmul.f32 %v402, %v508
          %v510 = vsub.f32 1.0, %v509
          %v511 = vmul.f32 %v508, %v510
          %v512 = vadd.f32 %v508, %v511
          %vm513 = vweird.f32 %v402
          %vm514 = vweird.f32 %v508
          %vm515 = vmor %vm513, %vm514
          %v516 = vsel %vm515, %v508, %v512
          %v517 = vand.u32 2147483647, %v402
          %vm518 = vcmp.eq.f32.partialorder %v517, 8.507059e+37
          %v519 = vand.u32 %v402, 2147483648
          %v520 = vor.u32 1.1754944e-38, %v519
          %v521 = vsel %vm518, %v520, %v516
          %v522 = vmul.f32 1.0, %v521
          %524 = vset.pattern.permute.xlu0 0
          %525 = vperm.xlu0 %524, %v417
          %v526 = vpop.permute.xlu0 %525
          %528 = vset.pattern.permute.xlu0 0
          %529 = vperm.xlu0 %528, %v432
          %v530 = vpop.permute.xlu0 %529
          %532 = vset.pattern.permute.xlu0 0
          %533 = vperm.xlu0 %532, %v447
          %v534 = vpop.permute.xlu0 %533
          %536 = vset.pattern.permute.xlu0 0
          %537 = vperm.xlu0 %536, %v462
          %v538 = vpop.permute.xlu0 %537
          %540 = vset.pattern.permute.xlu0 0
          %541 = vperm.xlu0 %540, %v477
          %v542 = vpop.permute.xlu0 %541
          %544 = vset.pattern.permute.xlu0 0
          %545 = vperm.xlu0 %544, %v492
          %v546 = vpop.permute.xlu0 %545
          %548 = vset.pattern.permute.xlu0 0
          %549 = vperm.xlu0 %548, %v507
          %v550 = vpop.permute.xlu0 %549
          %552 = vset.pattern.permute.xlu0 0
          %553 = vperm.xlu0 %552, %v522
          %v554 = vpop.permute.xlu0 %553
          %v556 = vunpack.c.l.s4 269488144
          %v557 = vunpack.c.0.s8 %v556
          %v558 = vperm.slane %v526, %v557
          %v560 = vunpack.c.l.s4 269488144
          %v561 = vunpack.c.0.s8 %v560
          %v562 = vperm.slane %v530, %v561
          %v564 = vunpack.c.l.s4 269488144
          %v565 = vunpack.c.0.s8 %v564
          %v566 = vperm.slane %v534, %v565
          %v568 = vunpack.c.l.s4 269488144
          %v569 = vunpack.c.0.s8 %v568
          %v570 = vperm.slane %v538, %v569
          %v572 = vunpack.c.l.s4 269488144
          %v573 = vunpack.c.0.s8 %v572
          %v574 = vperm.slane %v542, %v573
          %v576 = vunpack.c.l.s4 269488144
          %v577 = vunpack.c.0.s8 %v576
          %v578 = vperm.slane %v546, %v577
          %v580 = vunpack.c.l.s4 269488144
          %v581 = vunpack.c.0.s8 %v580
          %v582 = vperm.slane %v550, %v581
          %v584 = vunpack.c.l.s4 269488144
          %v585 = vunpack.c.0.s8 %v584
          %v586 = vperm.slane %v554, %v585
          %v595 = vmul.f32 %v240, %v558
          %v596 = vmul.f32 %v241, %v562
          %v597 = vmul.f32 %v242, %v566
          %v598 = vmul.f32 %v243, %v570
          %v599 = vmul.f32 %v244, %v574
          %v600 = vmul.f32 %v245, %v578
          %v601 = vmul.f32 %v246, %v582
          %v602 = vmul.f32 %v247, %v586
          %603 = vst [vmem:[%s235] sm:$0xf] %v595
          %604 = vst [vmem:[%s235 + $0x8] sm:$0xf] %v596
          %605 = vst [vmem:[%s235 + $0x10] sm:$0xf] %v599
          %606 = vst [vmem:[%s235 + $0x18] sm:$0xf] %v600
          %607 = vst [vmem:[%s235 + $0x4] sm:$0xf] %v597
          %608 = vst [vmem:[%s235 + $0xc] sm:$0xf] %v598
          %609 = vst [vmem:[%s235 + $0x14] sm:$0xf] %v601
          %610 = vst [vmem:[%s235 + $0x1c] sm:$0xf] %v602
        $region40: #{tpu_custom_call.1} parent=27 // pred_fallthru
          _
        %p611 = scmp.eq.s32.totalorder %s29, 1
        // Predicated region
        $region41: #{tpu_custom_call.1} parent=27 // pred_check
          %p612 = pneg %p611
        $region42: #{tpu_custom_call.1} parent=27 // pred_check_branch
          %614 = sbr.rel (%p612) target = $region44
        $region43: #{tpu_custom_call.1} parent=27 // pred_region
          %v624 = vunpack.c.l.s4 269488144
          %v625 = vunpack.c.0.s8 %v624
          %v626 = vperm.slane %v339, %v625
          %v628 = vunpack.c.l.s4 269488144
          %v629 = vunpack.c.0.s8 %v628
          %v630 = vperm.slane %v340, %v629
          %v632 = vunpack.c.l.s4 269488144
          %v633 = vunpack.c.0.s8 %v632
          %v634 = vperm.slane %v341, %v633
          %v636 = vunpack.c.l.s4 269488144
          %v637 = vunpack.c.0.s8 %v636
          %v638 = vperm.slane %v342, %v637
          %v640 = vunpack.c.l.s4 269488144
          %v641 = vunpack.c.0.s8 %v640
          %v642 = vperm.slane %v343, %v641
          %v644 = vunpack.c.l.s4 269488144
          %v645 = vunpack.c.0.s8 %v644
          %v646 = vperm.slane %v344, %v645
          %v648 = vunpack.c.l.s4 269488144
          %v649 = vunpack.c.0.s8 %v648
          %v650 = vperm.slane %v345, %v649
          %v652 = vunpack.c.l.s4 269488144
          %v653 = vunpack.c.0.s8 %v652
          %v654 = vperm.slane %v346, %v653
          %v663 = vsub.f32 %v240, %v626
          %v664 = vsub.f32 %v241, %v630
          %v665 = vsub.f32 %v242, %v634
          %v666 = vsub.f32 %v243, %v638
          %v667 = vsub.f32 %v244, %v642
          %v668 = vsub.f32 %v245, %v646
          %v669 = vsub.f32 %v246, %v650
          %v670 = vsub.f32 %v247, %v654
          %v671 = vmul.f32 %v663, %v663
          %v672 = vmul.f32 %v664, %v664
          %v673 = vmul.f32 %v665, %v665
          %v674 = vmul.f32 %v666, %v666
          %v675 = vmul.f32 %v667, %v667
          %v676 = vmul.f32 %v668, %v668
          %v677 = vmul.f32 %v669, %v669
          %v678 = vmul.f32 %v670, %v670
          %687 = vst [vmem:[#allocation1] ss:$4 sm:$0xff] %v671
          %v688 = vld.sshfl [vmem:[#allocation1] sm:$0xff pattern:$0x73625140]
          %v689 = vld.sshfl [vmem:[#allocation1 + $0x8] sm:$0xff pattern:$0x73625140]
          %s690 = scalar_lea.vmem [#allocation1], 32
          %691 = vst [vmem:[%s690] ss:$4 sm:$0xff] %v672
          %v692 = vld.sshfl [vmem:[#allocation1 + $0x20] sm:$0xff pattern:$0x73625140]
          %v693 = vld.sshfl [vmem:[#allocation1 + $0x28] sm:$0xff pattern:$0x73625140]
          %694 = vst [vmem:[#allocation1] ss:$4 sm:$0xff] %v673
          %v695 = vld.sshfl [vmem:[#allocation1] sm:$0xff pattern:$0x73625140]
          %v696 = vld.sshfl [vmem:[#allocation1 + $0x8] sm:$0xff pattern:$0x73625140]
          %697 = vst [vmem:[%s690] ss:$4 sm:$0xff] %v674
          %v698 = vld.sshfl [vmem:[#allocation1 + $0x20] sm:$0xff pattern:$0x73625140]
          %v699 = vld.sshfl [vmem:[#allocation1 + $0x28] sm:$0xff pattern:$0x73625140]
          %700 = vst [vmem:[#allocation1] ss:$4 sm:$0xff] %v675
          %v701 = vld.sshfl [vmem:[#allocation1] sm:$0xff pattern:$0x73625140]
          %v702 = vld.sshfl [vmem:[#allocation1 + $0x8] sm:$0xff pattern:$0x73625140]
          %703 = vst [vmem:[%s690] ss:$4 sm:$0xff] %v676
          %v704 = vld.sshfl [vmem:[#allocation1 + $0x20] sm:$0xff pattern:$0x73625140]
          %v705 = vld.sshfl [vmem:[#allocation1 + $0x28] sm:$0xff pattern:$0x73625140]
          %706 = vst [vmem:[#allocation1] ss:$4 sm:$0xff] %v677
          %v707 = vld.sshfl [vmem:[#allocation1] sm:$0xff pattern:$0x73625140]
          %v708 = vld.sshfl [vmem:[#allocation1 + $0x8] sm:$0xff pattern:$0x73625140]
          %709 = vst [vmem:[%s690] ss:$4 sm:$0xff] %v678
          %v710 = vld.sshfl [vmem:[#allocation1 + $0x20] sm:$0xff pattern:$0x73625140]
          %v711 = vld.sshfl [vmem:[#allocation1 + $0x28] sm:$0xff pattern:$0x73625140]
          %v728 = vsel %vm298, %v688, 0.0
          %v729 = vsel %vm298, %v689, 0.0
          %v730 = vadd.f32 %v728, %v729
          %731 = vadd.xlane.f32.xlu0 %v730
          %v732 = vpop.xlane.xlu0 %731
          %v733 = vsel %vm298, %v692, 0.0
          %v734 = vsel %vm298, %v693, 0.0
          %v735 = vadd.f32 %v733, %v734
          %736 = vadd.xlane.f32.xlu0 %v735
          %v737 = vpop.xlane.xlu0 %736
          %v738 = vsel %vm298, %v695, 0.0
          %v739 = vsel %vm298, %v696, 0.0
          %v740 = vadd.f32 %v738, %v739
          %741 = vadd.xlane.f32.xlu0 %v740
          %v742 = vpop.xlane.xlu0 %741
          %v743 = vsel %vm298, %v698, 0.0
          %v744 = vsel %vm298, %v699, 0.0
          %v745 = vadd.f32 %v743, %v744
          %746 = vadd.xlane.f32.xlu0 %v745
          %v747 = vpop.xlane.xlu0 %746
          %v748 = vsel %vm298, %v701, 0.0
          %v749 = vsel %vm298, %v702, 0.0
          %v750 = vadd.f32 %v748, %v749
          %751 = vadd.xlane.f32.xlu0 %v750
          %v752 = vpop.xlane.xlu0 %751
          %v753 = vsel %vm298, %v704, 0.0
          %v754 = vsel %vm298, %v705, 0.0
          %v755 = vadd.f32 %v753, %v754
          %756 = vadd.xlane.f32.xlu0 %v755
          %v757 = vpop.xlane.xlu0 %756
          %v758 = vsel %vm298, %v707, 0.0
          %v759 = vsel %vm298, %v708, 0.0
          %v760 = vadd.f32 %v758, %v759
          %761 = vadd.xlane.f32.xlu0 %v760
          %v762 = vpop.xlane.xlu0 %761
          %v763 = vsel %vm298, %v710, 0.0
          %v764 = vsel %vm298, %v711, 0.0
          %v765 = vadd.f32 %v763, %v764
          %766 = vadd.xlane.f32.xlu0 %v765
          %v767 = vpop.xlane.xlu0 %766
          %v768 = vmul.f32 %v732, 0.00390625
          %v769 = vmul.f32 %v737, 0.00390625
          %v770 = vmul.f32 %v742, 0.00390625
          %v771 = vmul.f32 %v747, 0.00390625
          %v772 = vmul.f32 %v752, 0.00390625
          %v773 = vmul.f32 %v757, 0.00390625
          %v774 = vmul.f32 %v762, 0.00390625
          %v775 = vmul.f32 %v767, 0.00390625
          %v776 = vadd.f32 %v768, 1e-05
          %v777 = vadd.f32 %v769, 1e-05
          %v778 = vadd.f32 %v770, 1e-05
          %v779 = vadd.f32 %v771, 1e-05
          %v780 = vadd.f32 %v772, 1e-05
          %v781 = vadd.f32 %v773, 1e-05
          %v782 = vadd.f32 %v774, 1e-05
          %v783 = vadd.f32 %v775, 1e-05
          %v784 = vrsqrt.pop %v776
          %v785 = vmul.f32 %v784, %v776
          %v786 = vmul.f32 %v785, %v784
          %v787 = vmul.f32 0.5, %v786
          %v788 = vsub.f32 1.5, %v787
          %v789 = vmul.f32 %v784, %v788
          %vm790 = vweird.f32 %v776
          %vm791 = vweird.f32 %v784
          %vm792 = vmor %vm790, %vm791
          %v793 = vsel %vm792, %v784, %v789
          %v794 = vrsqrt.pop %v777
          %v795 = vmul.f32 %v794, %v777
          %v796 = vmul.f32 %v795, %v794
          %v797 = vmul.f32 0.5, %v796
          %v798 = vsub.f32 1.5, %v797
          %v799 = vmul.f32 %v794, %v798
          %vm800 = vweird.f32 %v777
          %vm801 = vweird.f32 %v794
          %vm802 = vmor %vm800, %vm801
          %v803 = vsel %vm802, %v794, %v799
          %v804 = vrsqrt.pop %v778
          %v805 = vmul.f32 %v804, %v778
          %v806 = vmul.f32 %v805, %v804
          %v807 = vmul.f32 0.5, %v806
          %v808 = vsub.f32 1.5, %v807
          %v809 = vmul.f32 %v804, %v808
          %vm810 = vweird.f32 %v778
          %vm811 = vweird.f32 %v804
          %vm812 = vmor %vm810, %vm811
          %v813 = vsel %vm812, %v804, %v809
          %v814 = vrsqrt.pop %v779
          %v815 = vmul.f32 %v814, %v779
          %v816 = vmul.f32 %v815, %v814
          %v817 = vmul.f32 0.5, %v816
          %v818 = vsub.f32 1.5, %v817
          %v819 = vmul.f32 %v814, %v818
          %vm820 = vweird.f32 %v779
          %vm821 = vweird.f32 %v814
          %vm822 = vmor %vm820, %vm821
          %v823 = vsel %vm822, %v814, %v819
          %v824 = vrsqrt.pop %v780
          %v825 = vmul.f32 %v824, %v780
          %v826 = vmul.f32 %v825, %v824
          %v827 = vmul.f32 0.5, %v826
          %v828 = vsub.f32 1.5, %v827
          %v829 = vmul.f32 %v824, %v828
          %vm830 = vweird.f32 %v780
          %vm831 = vweird.f32 %v824
          %vm832 = vmor %vm830, %vm831
          %v833 = vsel %vm832, %v824, %v829
          %v834 = vrsqrt.pop %v781
          %v835 = vmul.f32 %v834, %v781
          %v836 = vmul.f32 %v835, %v834
          %v837 = vmul.f32 0.5, %v836
          %v838 = vsub.f32 1.5, %v837
          %v839 = vmul.f32 %v834, %v838
          %vm840 = vweird.f32 %v781
          %vm841 = vweird.f32 %v834
          %vm842 = vmor %vm840, %vm841
          %v843 = vsel %vm842, %v834, %v839
          %v844 = vrsqrt.pop %v782
          %v845 = vmul.f32 %v844, %v782
          %v846 = vmul.f32 %v845, %v844
          %v847 = vmul.f32 0.5, %v846
          %v848 = vsub.f32 1.5, %v847
          %v849 = vmul.f32 %v844, %v848
          %vm850 = vweird.f32 %v782
          %vm851 = vweird.f32 %v844
          %vm852 = vmor %vm850, %vm851
          %v853 = vsel %vm852, %v844, %v849
          %v854 = vrsqrt.pop %v783
          %v855 = vmul.f32 %v854, %v783
          %v856 = vmul.f32 %v855, %v854
          %v857 = vmul.f32 0.5, %v856
          %v858 = vsub.f32 1.5, %v857
          %v859 = vmul.f32 %v854, %v858
          %vm860 = vweird.f32 %v783
          %vm861 = vweird.f32 %v854
          %vm862 = vmor %vm860, %vm861
          %v863 = vsel %vm862, %v854, %v859
          %v873 = vunpack.c.l.s4 269488144
          %v874 = vunpack.c.0.s8 %v873
          %v875 = vperm.slane %v793, %v874
          %v877 = vunpack.c.l.s4 269488144
          %v878 = vunpack.c.0.s8 %v877
          %v879 = vperm.slane %v803, %v878
          %v881 = vunpack.c.l.s4 269488144
          %v882 = vunpack.c.0.s8 %v881
          %v883 = vperm.slane %v813, %v882
          %v885 = vunpack.c.l.s4 269488144
          %v886 = vunpack.c.0.s8 %v885
          %v887 = vperm.slane %v823, %v886
          %v889 = vunpack.c.l.s4 269488144
          %v890 = vunpack.c.0.s8 %v889
          %v891 = vperm.slane %v833, %v890
          %v893 = vunpack.c.l.s4 269488144
          %v894 = vunpack.c.0.s8 %v893
          %v895 = vperm.slane %v843, %v894
          %v897 = vunpack.c.l.s4 269488144
          %v898 = vunpack.c.0.s8 %v897
          %v899 = vperm.slane %v853, %v898
          %v901 = vunpack.c.l.s4 269488144
          %v902 = vunpack.c.0.s8 %v901
          %v903 = vperm.slane %v863, %v902
          %v912 = vmul.f32 %v663, %v875
          %v913 = vmul.f32 %v664, %v879
          %v914 = vmul.f32 %v665, %v883
          %v915 = vmul.f32 %v666, %v887
          %v916 = vmul.f32 %v667, %v891
          %v917 = vmul.f32 %v668, %v895
          %v918 = vmul.f32 %v669, %v899
          %v919 = vmul.f32 %v670, %v903
          %921 = vset.pattern.permute.xlu0 2
          %922 = vperm.xlu0 %921, %v248
          %v923 = vpop.permute.xlu0 %922
          %933 = vst [vmem:[#allocation1] ss:$4 sm:$0xff] %v912
          %v934 = vld.sshfl [vmem:[#allocation1] sm:$0xff pattern:$0x73625140]
          %v935 = vld.sshfl [vmem:[#allocation1 + $0x8] sm:$0xff pattern:$0x73625140]
          %s936 = scalar_lea.vmem [#allocation1], 32
          %937 = vst [vmem:[%s936] ss:$4 sm:$0xff] %v913
          %v938 = vld.sshfl [vmem:[#allocation1 + $0x20] sm:$0xff pattern:$0x73625140]
          %v939 = vld.sshfl [vmem:[#allocation1 + $0x28] sm:$0xff pattern:$0x73625140]
          %940 = vst [vmem:[#allocation1] ss:$4 sm:$0xff] %v914
          %v941 = vld.sshfl [vmem:[#allocation1] sm:$0xff pattern:$0x73625140]
          %v942 = vld.sshfl [vmem:[#allocation1 + $0x8] sm:$0xff pattern:$0x73625140]
          %943 = vst [vmem:[%s936] ss:$4 sm:$0xff] %v915
          %v944 = vld.sshfl [vmem:[#allocation1 + $0x20] sm:$0xff pattern:$0x73625140]
          %v945 = vld.sshfl [vmem:[#allocation1 + $0x28] sm:$0xff pattern:$0x73625140]
          %946 = vst [vmem:[#allocation1] ss:$4 sm:$0xff] %v916
          %v947 = vld.sshfl [vmem:[#allocation1] sm:$0xff pattern:$0x73625140]
          %v948 = vld.sshfl [vmem:[#allocation1 + $0x8] sm:$0xff pattern:$0x73625140]
          %949 = vst [vmem:[%s936] ss:$4 sm:$0xff] %v917
          %v950 = vld.sshfl [vmem:[#allocation1 + $0x20] sm:$0xff pattern:$0x73625140]
          %v951 = vld.sshfl [vmem:[#allocation1 + $0x28] sm:$0xff pattern:$0x73625140]
          %952 = vst [vmem:[#allocation1] ss:$4 sm:$0xff] %v918
          %v953 = vld.sshfl [vmem:[#allocation1] sm:$0xff pattern:$0x73625140]
          %v954 = vld.sshfl [vmem:[#allocation1 + $0x8] sm:$0xff pattern:$0x73625140]
          %955 = vst [vmem:[%s936] ss:$4 sm:$0xff] %v919
          %v956 = vld.sshfl [vmem:[#allocation1 + $0x20] sm:$0xff pattern:$0x73625140]
          %v957 = vld.sshfl [vmem:[#allocation1 + $0x28] sm:$0xff pattern:$0x73625140]
          %v974 = vmul.f32 %v923, %v934
          %v975 = vmul.f32 %v923, %v935
          %v976 = vmul.f32 %v923, %v938
          %v977 = vmul.f32 %v923, %v939
          %v978 = vmul.f32 %v923, %v941
          %v979 = vmul.f32 %v923, %v942
          %v980 = vmul.f32 %v923, %v944
          %v981 = vmul.f32 %v923, %v945
          %v982 = vmul.f32 %v923, %v947
          %v983 = vmul.f32 %v923, %v948
          %v984 = vmul.f32 %v923, %v950
          %v985 = vmul.f32 %v923, %v951
          %v986 = vmul.f32 %v923, %v953
          %v987 = vmul.f32 %v923, %v954
          %v988 = vmul.f32 %v923, %v956
          %v989 = vmul.f32 %v923, %v957
          %990 = vset.pattern.permute.xlu0 3
          %991 = vperm.xlu0 %990, %v248
          %v992 = vpop.permute.xlu0 %991
          %v994 = vadd.f32 %v974, %v992
          %v995 = vadd.f32 %v975, %v992
          %v996 = vadd.f32 %v976, %v992
          %v997 = vadd.f32 %v977, %v992
          %v998 = vadd.f32 %v978, %v992
          %v999 = vadd.f32 %v979, %v992
          %v1000 = vadd.f32 %v980, %v992
          %v1001 = vadd.f32 %v981, %v992
          %v1002 = vadd.f32 %v982, %v992
          %v1003 = vadd.f32 %v983, %v992
          %v1004 = vadd.f32 %v984, %v992
          %v1005 = vadd.f32 %v985, %v992
          %v1006 = vadd.f32 %v986, %v992
          %v1007 = vadd.f32 %v987, %v992
          %v1008 = vadd.f32 %v988, %v992
          %v1009 = vadd.f32 %v989, %v992
          %1010 = vset.pattern.permute.xlu0 0
          %1011 = vperm.xlu0 %1010, %v248
          %v1012 = vpop.permute.xlu0 %1011
          %v1014 = vmul.f32 %v1012, %v994
          %v1015 = vmul.f32 %v1012, %v995
          %v1016 = vmul.f32 %v1012, %v996
          %v1017 = vmul.f32 %v1012, %v997
          %v1018 = vmul.f32 %v1012, %v998
          %v1019 = vmul.f32 %v1012, %v999
          %v1020 = vmul.f32 %v1012, %v1000
          %v1021 = vmul.f32 %v1012, %v1001
          %v1022 = vmul.f32 %v1012, %v1002
          %v1023 = vmul.f32 %v1012, %v1003
          %v1024 = vmul.f32 %v1012, %v1004
          %v1025 = vmul.f32 %v1012, %v1005
          %v1026 = vmul.f32 %v1012, %v1006
          %v1027 = vmul.f32 %v1012, %v1007
          %v1028 = vmul.f32 %v1012, %v1008
          %v1029 = vmul.f32 %v1012, %v1009
          %1030 = vset.pattern.permute.xlu0 1
          %1031 = vperm.xlu0 %1030, %v248
          %v1032 = vpop.permute.xlu0 %1031
          %v1034 = vadd.f32 %v1014, %v1032
          %v1035 = vadd.f32 %v1015, %v1032
          %v1036 = vadd.f32 %v1016, %v1032
          %v1037 = vadd.f32 %v1017, %v1032
          %v1038 = vadd.f32 %v1018, %v1032
          %v1039 = vadd.f32 %v1019, %v1032
          %v1040 = vadd.f32 %v1020, %v1032
          %v1041 = vadd.f32 %v1021, %v1032
          %v1042 = vadd.f32 %v1022, %v1032
          %v1043 = vadd.f32 %v1023, %v1032
          %v1044 = vadd.f32 %v1024, %v1032
          %v1045 = vadd.f32 %v1025, %v1032
          %v1046 = vadd.f32 %v1026, %v1032
          %v1047 = vadd.f32 %v1027, %v1032
          %v1048 = vadd.f32 %v1028, %v1032
          %v1049 = vadd.f32 %v1029, %v1032
          %v1050 = vxor.u32 %v1034, 2147483648
          %v1051 = vxor.u32 %v1035, 2147483648
          %v1052 = vxor.u32 %v1036, 2147483648
          %v1053 = vxor.u32 %v1037, 2147483648
          %v1054 = vxor.u32 %v1038, 2147483648
          %v1055 = vxor.u32 %v1039, 2147483648
          %v1056 = vxor.u32 %v1040, 2147483648
          %v1057 = vxor.u32 %v1041, 2147483648
          %v1058 = vxor.u32 %v1042, 2147483648
          %v1059 = vxor.u32 %v1043, 2147483648
          %v1060 = vxor.u32 %v1044, 2147483648
          %v1061 = vxor.u32 %v1045, 2147483648
          %v1062 = vxor.u32 %v1046, 2147483648
          %v1063 = vxor.u32 %v1047, 2147483648
          %v1064 = vxor.u32 %v1048, 2147483648
          %v1065 = vxor.u32 %v1049, 2147483648
          %v1066 = vmul.f32 %v1050, 1.442695
          %v1067 = vpow.pop %v1066
          %v1068 = vmul.f32 %v1051, 1.442695
          %v1069 = vpow.pop %v1068
          %v1070 = vmul.f32 %v1052, 1.442695
          %v1071 = vpow.pop %v1070
          %v1072 = vmul.f32 %v1053, 1.442695
          %v1073 = vpow.pop %v1072
          %v1074 = vmul.f32 %v1054, 1.442695
          %v1075 = vpow.pop %v1074
          %v1076 = vmul.f32 %v1055, 1.442695
          %v1077 = vpow.pop %v1076
          %v1078 = vmul.f32 %v1056, 1.442695
          %v1079 = vpow.pop %v1078
          %v1080 = vmul.f32 %v1057, 1.442695
          %v1081 = vpow.pop %v1080
          %v1082 = vmul.f32 %v1058, 1.442695
          %v1083 = vpow.pop %v1082
          %v1084 = vmul.f32 %v1059, 1.442695
          %v1085 = vpow.pop %v1084
          %v1086 = vmul.f32 %v1060, 1.442695
          %v1087 = vpow.pop %v1086
          %v1088 = vmul.f32 %v1061, 1.442695
          %v1089 = vpow.pop %v1088
          %v1090 = vmul.f32 %v1062, 1.442695
          %v1091 = vpow.pop %v1090
          %v1092 = vmul.f32 %v1063, 1.442695
          %v1093 = vpow.pop %v1092
          %v1094 = vmul.f32 %v1064, 1.442695
          %v1095 = vpow.pop %v1094
          %v1096 = vmul.f32 %v1065, 1.442695
          %v1097 = vpow.pop %v1096
          %v1098 = vadd.f32 %v1067, 1.0
          %v1099 = vadd.f32 %v1069, 1.0
          %v1100 = vadd.f32 %v1071, 1.0
          %v1101 = vadd.f32 %v1073, 1.0
          %v1102 = vadd.f32 %v1075, 1.0
          %v1103 = vadd.f32 %v1077, 1.0
          %v1104 = vadd.f32 %v1079, 1.0
          %v1105 = vadd.f32 %v1081, 1.0
          %v1106 = vadd.f32 %v1083, 1.0
          %v1107 = vadd.f32 %v1085, 1.0
          %v1108 = vadd.f32 %v1087, 1.0
          %v1109 = vadd.f32 %v1089, 1.0
          %v1110 = vadd.f32 %v1091, 1.0
          %v1111 = vadd.f32 %v1093, 1.0
          %v1112 = vadd.f32 %v1095, 1.0
          %v1113 = vadd.f32 %v1097, 1.0
          %v1114 = vrcp.pop %v1098
          %v1115 = vmul.f32 %v1098, %v1114
          %v1116 = vsub.f32 1.0, %v1115
          %v1117 = vmul.f32 %v1114, %v1116
          %v1118 = vadd.f32 %v1114, %v1117
          %vm1119 = vweird.f32 %v1098
          %vm1120 = vweird.f32 %v1114
          %vm1121 = vmor %vm1119, %vm1120
          %v1122 = vsel %vm1121, %v1114, %v1118
          %v1123 = vand.u32 2147483647, %v1098
          %vm1124 = vcmp.eq.f32.partialorder %v1123, 8.507059e+37
          %v1125 = vand.u32 %v1098, 2147483648
          %v1126 = vor.u32 1.1754944e-38, %v1125
          %v1127 = vsel %vm1124, %v1126, %v1122
          %v1128 = vmul.f32 1.0, %v1127
          %v1129 = vrcp.pop %v1099
          %v1130 = vmul.f32 %v1099, %v1129
          %v1131 = vsub.f32 1.0, %v1130
          %v1132 = vmul.f32 %v1129, %v1131
          %v1133 = vadd.f32 %v1129, %v1132
          %vm1134 = vweird.f32 %v1099
          %vm1135 = vweird.f32 %v1129
          %vm1136 = vmor %vm1134, %vm1135
          %v1137 = vsel %vm1136, %v1129, %v1133
          %v1138 = vand.u32 2147483647, %v1099
          %vm1139 = vcmp.eq.f32.partialorder %v1138, 8.507059e+37
          %v1140 = vand.u32 %v1099, 2147483648
          %v1141 = vor.u32 1.1754944e-38, %v1140
          %v1142 = vsel %vm1139, %v1141, %v1137
          %v1143 = vmul.f32 1.0, %v1142
          %v1144 = vrcp.pop %v1100
          %v1145 = vmul.f32 %v1100, %v1144
          %v1146 = vsub.f32 1.0, %v1145
          %v1147 = vmul.f32 %v1144, %v1146
          %v1148 = vadd.f32 %v1144, %v1147
          %vm1149 = vweird.f32 %v1100
          %vm1150 = vweird.f32 %v1144
          %vm1151 = vmor %vm1149, %vm1150
          %v1152 = vsel %vm1151, %v1144, %v1148
          %v1153 = vand.u32 2147483647, %v1100
          %vm1154 = vcmp.eq.f32.partialorder %v1153, 8.507059e+37
          %v1155 = vand.u32 %v1100, 2147483648
          %v1156 = vor.u32 1.1754944e-38, %v1155
          %v1157 = vsel %vm1154, %v1156, %v1152
          %v1158 = vmul.f32 1.0, %v1157
          %v1159 = vrcp.pop %v1101
          %v1160 = vmul.f32 %v1101, %v1159
          %v1161 = vsub.f32 1.0, %v1160
          %v1162 = vmul.f32 %v1159, %v1161
          %v1163 = vadd.f32 %v1159, %v1162
          %vm1164 = vweird.f32 %v1101
          %vm1165 = vweird.f32 %v1159
          %vm1166 = vmor %vm1164, %vm1165
          %v1167 = vsel %vm1166, %v1159, %v1163
          %v1168 = vand.u32 2147483647, %v1101
          %vm1169 = vcmp.eq.f32.partialorder %v1168, 8.507059e+37
          %v1170 = vand.u32 %v1101, 2147483648
          %v1171 = vor.u32 1.1754944e-38, %v1170
          %v1172 = vsel %vm1169, %v1171, %v1167
          %v1173 = vmul.f32 1.0, %v1172
          %v1174 = vrcp.pop %v1102
          %v1175 = vmul.f32 %v1102, %v1174
          %v1176 = vsub.f32 1.0, %v1175
          %v1177 = vmul.f32 %v1174, %v1176
          %v1178 = vadd.f32 %v1174, %v1177
          %vm1179 = vweird.f32 %v1102
          %vm1180 = vweird.f32 %v1174
          %vm1181 = vmor %vm1179, %vm1180
          %v1182 = vsel %vm1181, %v1174, %v1178
          %v1183 = vand.u32 2147483647, %v1102
          %vm1184 = vcmp.eq.f32.partialorder %v1183, 8.507059e+37
          %v1185 = vand.u32 %v1102, 2147483648
          %v1186 = vor.u32 1.1754944e-38, %v1185
          %v1187 = vsel %vm1184, %v1186, %v1182
          %v1188 = vmul.f32 1.0, %v1187
          %v1189 = vrcp.pop %v1103
          %v1190 = vmul.f32 %v1103, %v1189
          %v1191 = vsub.f32 1.0, %v1190
          %v1192 = vmul.f32 %v1189, %v1191
          %v1193 = vadd.f32 %v1189, %v1192
          %vm1194 = vweird.f32 %v1103
          %vm1195 = vweird.f32 %v1189
          %vm1196 = vmor %vm1194, %vm1195
          %v1197 = vsel %vm1196, %v1189, %v1193
          %v1198 = vand.u32 2147483647, %v1103
          %vm1199 = vcmp.eq.f32.partialorder %v1198, 8.507059e+37
          %v1200 = vand.u32 %v1103, 2147483648
          %v1201 = vor.u32 1.1754944e-38, %v1200
          %v1202 = vsel %vm1199, %v1201, %v1197
          %v1203 = vmul.f32 1.0, %v1202
          %v1204 = vrcp.pop %v1104
          %v1205 = vmul.f32 %v1104, %v1204
          %v1206 = vsub.f32 1.0, %v1205
          %v1207 = vmul.f32 %v1204, %v1206
          %v1208 = vadd.f32 %v1204, %v1207
          %vm1209 = vweird.f32 %v1104
          %vm1210 = vweird.f32 %v1204
          %vm1211 = vmor %vm1209, %vm1210
          %v1212 = vsel %vm1211, %v1204, %v1208
          %v1213 = vand.u32 2147483647, %v1104
          %vm1214 = vcmp.eq.f32.partialorder %v1213, 8.507059e+37
          %v1215 = vand.u32 %v1104, 2147483648
          %v1216 = vor.u32 1.1754944e-38, %v1215
          %v1217 = vsel %vm1214, %v1216, %v1212
          %v1218 = vmul.f32 1.0, %v1217
          %v1219 = vrcp.pop %v1105
          %v1220 = vmul.f32 %v1105, %v1219
          %v1221 = vsub.f32 1.0, %v1220
          %v1222 = vmul.f32 %v1219, %v1221
          %v1223 = vadd.f32 %v1219, %v1222
          %vm1224 = vweird.f32 %v1105
          %vm1225 = vweird.f32 %v1219
          %vm1226 = vmor %vm1224, %vm1225
          %v1227 = vsel %vm1226, %v1219, %v1223
          %v1228 = vand.u32 2147483647, %v1105
          %vm1229 = vcmp.eq.f32.partialorder %v1228, 8.507059e+37
          %v1230 = vand.u32 %v1105, 2147483648
          %v1231 = vor.u32 1.1754944e-38, %v1230
          %v1232 = vsel %vm1229, %v1231, %v1227
          %v1233 = vmul.f32 1.0, %v1232
          %v1234 = vrcp.pop %v1106
          %v1235 = vmul.f32 %v1106, %v1234
          %v1236 = vsub.f32 1.0, %v1235
          %v1237 = vmul.f32 %v1234, %v1236
          %v1238 = vadd.f32 %v1234, %v1237
          %vm1239 = vweird.f32 %v1106
          %vm1240 = vweird.f32 %v1234
          %vm1241 = vmor %vm1239, %vm1240
          %v1242 = vsel %vm1241, %v1234, %v1238
          %v1243 = vand.u32 2147483647, %v1106
          %vm1244 = vcmp.eq.f32.partialorder %v1243, 8.507059e+37
          %v1245 = vand.u32 %v1106, 2147483648
          %v1246 = vor.u32 1.1754944e-38, %v1245
          %v1247 = vsel %vm1244, %v1246, %v1242
          %v1248 = vmul.f32 1.0, %v1247
          %v1249 = vrcp.pop %v1107
          %v1250 = vmul.f32 %v1107, %v1249
          %v1251 = vsub.f32 1.0, %v1250
          %v1252 = vmul.f32 %v1249, %v1251
          %v1253 = vadd.f32 %v1249, %v1252
          %vm1254 = vweird.f32 %v1107
          %vm1255 = vweird.f32 %v1249
          %vm1256 = vmor %vm1254, %vm1255
          %v1257 = vsel %vm1256, %v1249, %v1253
          %v1258 = vand.u32 2147483647, %v1107
          %vm1259 = vcmp.eq.f32.partialorder %v1258, 8.507059e+37
          %v1260 = vand.u32 %v1107, 2147483648
          %v1261 = vor.u32 1.1754944e-38, %v1260
          %v1262 = vsel %vm1259, %v1261, %v1257
          %v1263 = vmul.f32 1.0, %v1262
          %v1264 = vrcp.pop %v1108
          %v1265 = vmul.f32 %v1108, %v1264
          %v1266 = vsub.f32 1.0, %v1265
          %v1267 = vmul.f32 %v1264, %v1266
          %v1268 = vadd.f32 %v1264, %v1267
          %vm1269 = vweird.f32 %v1108
          %vm1270 = vweird.f32 %v1264
          %vm1271 = vmor %vm1269, %vm1270
          %v1272 = vsel %vm1271, %v1264, %v1268
          %v1273 = vand.u32 2147483647, %v1108
          %vm1274 = vcmp.eq.f32.partialorder %v1273, 8.507059e+37
          %v1275 = vand.u32 %v1108, 2147483648
          %v1276 = vor.u32 1.1754944e-38, %v1275
          %v1277 = vsel %vm1274, %v1276, %v1272
          %v1278 = vmul.f32 1.0, %v1277
          %v1279 = vrcp.pop %v1109
          %v1280 = vmul.f32 %v1109, %v1279
          %v1281 = vsub.f32 1.0, %v1280
          %v1282 = vmul.f32 %v1279, %v1281
          %v1283 = vadd.f32 %v1279, %v1282
          %vm1284 = vweird.f32 %v1109
          %vm1285 = vweird.f32 %v1279
          %vm1286 = vmor %vm1284, %vm1285
          %v1287 = vsel %vm1286, %v1279, %v1283
          %v1288 = vand.u32 2147483647, %v1109
          %vm1289 = vcmp.eq.f32.partialorder %v1288, 8.507059e+37
          %v1290 = vand.u32 %v1109, 2147483648
          %v1291 = vor.u32 1.1754944e-38, %v1290
          %v1292 = vsel %vm1289, %v1291, %v1287
          %v1293 = vmul.f32 1.0, %v1292
          %v1294 = vrcp.pop %v1110
          %v1295 = vmul.f32 %v1110, %v1294
          %v1296 = vsub.f32 1.0, %v1295
          %v1297 = vmul.f32 %v1294, %v1296
          %v1298 = vadd.f32 %v1294, %v1297
          %vm1299 = vweird.f32 %v1110
          %vm1300 = vweird.f32 %v1294
          %vm1301 = vmor %vm1299, %vm1300
          %v1302 = vsel %vm1301, %v1294, %v1298
          %v1303 = vand.u32 2147483647, %v1110
          %vm1304 = vcmp.eq.f32.partialorder %v1303, 8.507059e+37
          %v1305 = vand.u32 %v1110, 2147483648
          %v1306 = vor.u32 1.1754944e-38, %v1305
          %v1307 = vsel %vm1304, %v1306, %v1302
          %v1308 = vmul.f32 1.0, %v1307
          %v1309 = vrcp.pop %v1111
          %v1310 = vmul.f32 %v1111, %v1309
          %v1311 = vsub.f32 1.0, %v1310
          %v1312 = vmul.f32 %v1309, %v1311
          %v1313 = vadd.f32 %v1309, %v1312
          %vm1314 = vweird.f32 %v1111
          %vm1315 = vweird.f32 %v1309
          %vm1316 = vmor %vm1314, %vm1315
          %v1317 = vsel %vm1316, %v1309, %v1313
          %v1318 = vand.u32 2147483647, %v1111
          %vm1319 = vcmp.eq.f32.partialorder %v1318, 8.507059e+37
          %v1320 = vand.u32 %v1111, 2147483648
          %v1321 = vor.u32 1.1754944e-38, %v1320
          %v1322 = vsel %vm1319, %v1321, %v1317
          %v1323 = vmul.f32 1.0, %v1322
          %v1324 = vrcp.pop %v1112
          %v1325 = vmul.f32 %v1112, %v1324
          %v1326 = vsub.f32 1.0, %v1325
          %v1327 = vmul.f32 %v1324, %v1326
          %v1328 = vadd.f32 %v1324, %v1327
          %vm1329 = vweird.f32 %v1112
          %vm1330 = vweird.f32 %v1324
          %vm1331 = vmor %vm1329, %vm1330
          %v1332 = vsel %vm1331, %v1324, %v1328
          %v1333 = vand.u32 2147483647, %v1112
          %vm1334 = vcmp.eq.f32.partialorder %v1333, 8.507059e+37
          %v1335 = vand.u32 %v1112, 2147483648
          %v1336 = vor.u32 1.1754944e-38, %v1335
          %v1337 = vsel %vm1334, %v1336, %v1332
          %v1338 = vmul.f32 1.0, %v1337
          %v1339 = vrcp.pop %v1113
          %v1340 = vmul.f32 %v1113, %v1339
          %v1341 = vsub.f32 1.0, %v1340
          %v1342 = vmul.f32 %v1339, %v1341
          %v1343 = vadd.f32 %v1339, %v1342
          %vm1344 = vweird.f32 %v1113
          %vm1345 = vweird.f32 %v1339
          %vm1346 = vmor %vm1344, %vm1345
          %v1347 = vsel %vm1346, %v1339, %v1343
          %v1348 = vand.u32 2147483647, %v1113
          %vm1349 = vcmp.eq.f32.partialorder %v1348, 8.507059e+37
          %v1350 = vand.u32 %v1113, 2147483648
          %v1351 = vor.u32 1.1754944e-38, %v1350
          %v1352 = vsel %vm1349, %v1351, %v1347
          %v1353 = vmul.f32 1.0, %v1352
          %v1370 = vrot.slane %v1143, 6
          %v1371 = vrot.slane %v1173, 6
          %v1372 = vrot.slane %v1203, 6
          %v1373 = vrot.slane %v1233, 6
          %v1374 = vrot.slane %v1263, 6
          %v1375 = vrot.slane %v1293, 6
          %v1376 = vrot.slane %v1323, 6
          %v1377 = vrot.slane %v1353, 6
          %v1378 = vsel %vm298, %v1128, %v1370
          %v1379 = vsel %vm298, %v1158, %v1371
          %v1380 = vsel %vm298, %v1188, %v1372
          %v1381 = vsel %vm298, %v1218, %v1373
          %v1382 = vsel %vm298, %v1248, %v1374
          %v1383 = vsel %vm298, %v1278, %v1375
          %v1384 = vsel %vm298, %v1308, %v1376
          %v1385 = vsel %vm298, %v1338, %v1377
          %v1394 = vmul.f32 %v240, %v1378
          %v1395 = vmul.f32 %v241, %v1379
          %v1396 = vmul.f32 %v242, %v1380
          %v1397 = vmul.f32 %v243, %v1381
          %v1398 = vmul.f32 %v244, %v1382
          %v1399 = vmul.f32 %v245, %v1383
          %v1400 = vmul.f32 %v246, %v1384
          %v1401 = vmul.f32 %v247, %v1385
          %1402 = vst [vmem:[%s235] sm:$0xf] %v1394
          %1403 = vst [vmem:[%s235 + $0x8] sm:$0xf] %v1395
          %1404 = vst [vmem:[%s235 + $0x10] sm:$0xf] %v1398
          %1405 = vst [vmem:[%s235 + $0x18] sm:$0xf] %v1399
          %1406 = vst [vmem:[%s235 + $0x4] sm:$0xf] %v1396
          %1407 = vst [vmem:[%s235 + $0xc] sm:$0xf] %v1397
          %1408 = vst [vmem:[%s235 + $0x14] sm:$0xf] %v1400
          %1409 = vst [vmem:[%s235 + $0x1c] sm:$0xf] %v1401
        $region44: #{tpu_custom_call.1} parent=27 // pred_fallthru
          _
        %s1410 = sand.u32 %s109, 1
        %s1411 = scalar_lea.sflag [#allocation4], %s1410
        %s1412 = sand.u32 %s109, 1
        %s1413 = smul.addr %s1412, 32
        %s1414 = scalar_lea.vmem [#allocation7], %s1413
        // Predicated region
        $region45: #{tpu_custom_call.1} parent=27 // pred_check
          %p1415 = pneg %p119
        $region46: #{tpu_custom_call.1} parent=27 // pred_check_branch
          %1417 = sbr.rel (%p1415) target = $region48
        $region47: #{tpu_custom_call.1} parent=27 // pred_region
          %s1418 = smul.u32 2, %s27
          %s1419 = smul.u32 2, %s28
          %1421 = vsyncadd %s1411, 0
          %s1422 = smul.addr %s29, 4
          %s1423 = smul.addr %s1419, 8
          %s1424 = sadd.s32 %s1422, %s1423
          %s1425 = smul.addr %s1418, 16
          %s1426 = sadd.s32 %s1424, %s1425
          %s1427 = smul.addr %s1426, 2
          %s1428 = scalar_lea.hbm %s2, %s1427
          %s1429 = sshll.u32 %s1414, 4
          %s1430 = int_to_ptr.vmem [resolvable:$true] %s1429
          %s1431 = sshll.u32 %s1428, 4
          %s1432 = int_to_ptr.hbm [resolvable:$true] %s1431
          %1437 = dma.vmem_to_hbm [thread:$0]  %s1430, 512, %s1432, %s1411, 128, 256, 8
        $region48: #{tpu_custom_call.1} parent=27 // pred_fallthru
          _
      $region28: #{tpu_custom_call.1} parent=5 // pred_fallthru
        _
      %p1438 = scmp.le.s32.totalorder 2, %s17
      // Predicated region
      $region49: #{tpu_custom_call.1} parent=5 // pred_check
        %p1439 = pneg %p1438
      $region50: #{tpu_custom_call.1} parent=5 // pred_check_branch
        %1441 = sbr.rel (%p1439) target = $region52
      $region51: #{tpu_custom_call.1} parent=5 // pred_region
        %s1442 = ssub.s32 %s17, 2
        // Predicated region
        $region53: #{tpu_custom_call.1} parent=51 // pred_check
          %p1443 = pneg %p125
        $region54: #{tpu_custom_call.1} parent=51 // pred_check_branch
          %1445 = sbr.rel (%p1443) target = $region56
        $region55: #{tpu_custom_call.1} parent=51 // pred_region
          %s1446 = sand.u32 %s110, 1
          %s1447 = scalar_lea.sflag [#allocation4], %s1446
          %s1448 = sand.u32 %s110, 1
          %s1449 = smul.addr %s1448, 32
          %s1450 = scalar_lea.vmem [#allocation7], %s1449
          %1452 = dma.done %s1447, 512
        $region56: #{tpu_custom_call.1} parent=51 // pred_fallthru
          _
      $region52: #{tpu_custom_call.1} parent=5 // pred_fallthru
        _
    $region6: #{tpu_custom_call.1} parent=1 // loop_footer
      %s21 = sadd.s32 1, %s17
    $region7: #{tpu_custom_call.1} parent=1 // loop_footer_branch
      %16 = sbr.rel target = $region3
    $region8: #{tpu_custom_call.1} parent=1 // loop_exit
      _
    %1453 = vsyncpa [#allocation3], 1
    %s1454 = scalar_lea.sflag [#allocation3], 1
    %1455 = vsyncpa %s1454, 1
    %1456 = vsyncpa [#allocation6], 1
    %s1457 = scalar_lea.sflag [#allocation6], 1
    %1458 = vsyncpa %s1457, 1
    %1459 = vsyncpa [#allocation4], 1
    %s1460 = scalar_lea.sflag [#allocation4], 1
    %1461 = vsyncpa %s1460, 1

</llo_original>
